<compile_context>
chip_gen: v7x
topology: tpu7x:2x2x1
jax: 0.10.0
libtpu: 0.0.40
codegen_flags: <defaults>
</compile_context>

<pallas_src>
import functools
import math

import jax
import jax.numpy as jnp
from jax.experimental import pallas as pl
from jax.experimental.pallas import tpu as pltpu

# TODO(synk): exact default threshold / Heaviside(0) convention of
# surrogate.HeavisideBoxcarCall is not in the snippet; thresh=0.5 and `>=` used.
_DEFAULT_THRESH = 0.5


def _round_up(x, m):
    return ((x + m - 1) // m) * m


def _num_tensorcores():
    """Best-effort TensorCore count per chip (1 on v5e/v6e, 2 on v7x)."""
    try:
        info = pltpu.get_tpu_info()
    except Exception:
        return 1
    for name in ("num_cores", "core_count", "num_tensorcores",
                 "tensorcore_count", "cores_per_chip"):
        v = getattr(info, name, None)
        try:
            v = int(v)
        except (TypeError, ValueError):
            continue
        if 1 <= v <= 8:
            return v
    return 1


def _vmem_capacity_bytes():
    try:
        return int(pltpu.get_tpu_info().vmem_capacity_bytes)
    except Exception:
        return 64 * 1024 * 1024  # conservative (v7x per-core figure)


def _lif_body(decay, thresh, u_ref, s_ref, i_ref, u_out_ref, s_out_ref):
    u = u_ref[...]
    s = s_ref[...].astype(u.dtype)          # S_before may be f32 / bf16 / int8 / bool
    u_new = decay * u * (1.0 - s) + i_ref[...].astype(u.dtype)
    u_out_ref[...] = u_new.astype(u_out_ref.dtype)
    s_out_ref[...] = (u_new >= thresh).astype(s_out_ref.dtype)


def _lif_kernel(u_ref, s_ref, i_ref, u_out_ref, s_out_ref, *, decay, thresh):
    _lif_body(decay, thresh, u_ref, s_ref, i_ref, u_out_ref, s_out_ref)


def _lif_kernel_dyn(decay_ref, u_ref, s_ref, i_ref, u_out_ref, s_out_ref, *, thresh):
    _lif_body(decay_ref[0], thresh, u_ref, s_ref, i_ref, u_out_ref, s_out_ref)


def lif_node_forward(LIF_U, S_before, I_in, *, LIF_tau=2.0,
                     thresh=_DEFAULT_THRESH, spike_dtype=None,
                     allow_input_fusion=None):
    """Pallas implementation of LIF_Node.forward. Returns (LIF_U_new, LIF_S).

    S_before may be any numeric dtype (int8/bool recommended to cut HBM
    traffic); `spike_dtype` selects the spike output dtype (default:
    LIF_U.dtype, matching the PyTorch module; jnp.int8 recommended).
    `allow_input_fusion` (list of one bool per pallas input) is forwarded to
    the Mosaic compiler so a cheap elementwise producer of I_in can fuse in.
    """
    assert LIF_U.shape == S_before.shape == I_in.shape
    orig_shape = LIF_U.shape
    u_dtype = LIF_U.dtype
    u_itemsize = jnp.dtype(u_dtype).itemsize
    s_out_dtype = jnp.dtype(spike_dtype) if spike_dtype is not None else u_dtype

    # --- decay = sigmoid(LIF_tau): Python math when concrete, SMEM scalar if traced.
    try:
        decay = 1.0 / (1.0 + math.exp(-float(LIF_tau)))
        dynamic_decay = False
    except (TypeError, jax.errors.ConcretizationTypeError):
        decay = None
        dynamic_decay = True

    # --- chip-dependent tiling budget.
    num_cores = _num_tensorcores()
    vmem_cap = _vmem_capacity_bytes()
    if num_cores == 1 and vmem_cap >= 100 * 1024 * 1024:   # v5e / v6e: 128 MiB VMEM
        target_block_bytes = 4 * 1024 * 1024
        vmem_limit = 64 * 1024 * 1024
    else:                                                   # v7x: 64 MiB per TC
        target_block_bytes = 2 * 1024 * 1024
        vmem_limit = 32 * 1024 * 1024

    n = LIF_U.size
    last = int(orig_shape[-1]) if len(orig_shape) else 1

    # --- choose a free (no-copy) contiguous 2-D lane-dense view.
    if n % 128 == 0:
        lane_dim = 128
        for cand in (1024, 512, 256):
            if n % cand == 0:
                lane_dim = cand
                break
    elif last * u_itemsize <= target_block_bytes:
        # Non-128-multiple size: use (rows, last_dim) contiguous view. Less
        # lane-dense, but zero extra HBM passes (no pad / slice of any stream).
        lane_dim = last
    else:
        # Huge array with non-128-multiple length and an untileable last dim
        # (e.g. giant odd-length 1-D): aligned prefix through the fast path,
        # tail (<128 elems) in plain XLA.
        n_main = (n // 128) * 128
        fu, fs, fi = jnp.ravel(LIF_U), jnp.ravel(S_before), jnp.ravel(I_in)
        u_main, s_main = lif_node_forward(
            fu[:n_main], fs[:n_main], fi[:n_main],
            LIF_tau=LIF_tau, thresh=thresh, spike_dtype=s_out_dtype)
        if dynamic_decay:
            d = jax.nn.sigmoid(jnp.asarray(LIF_tau, jnp.float32)).astype(u_dtype)
        else:
            d = jnp.asarray(decay, u_dtype)
        u_t = d * fu[n_main:] * (1.0 - fs[n_main:].astype(u_dtype)) \
            + fi[n_main:].astype(u_dtype)
        s_t = (u_t >= thresh).astype(s_out_dtype)
        u_out = jnp.concatenate([jnp.ravel(u_main), u_t]).reshape(orig_shape)
        s_out = jnp.concatenate([jnp.ravel(s_main), s_t]).reshape(orig_shape)
        return u_out, s_out

    rows = n // lane_dim
    u2 = jnp.ravel(LIF_U).reshape(rows, lane_dim)      # contiguous: free reshapes
    s2 = jnp.ravel(S_before).reshape(rows, lane_dim)
    i2 = jnp.ravel(I_in).reshape(rows, lane_dim)

    # Block sizing: budget against the VMEM-padded lane width so narrow
    # fallback views (last dim < 128) cannot blow the scoped VMEM limit.
    padded_lane = _round_up(lane_dim, 128)
    target_rows = max(32, (target_block_bytes // (padded_lane * u_itemsize)) // 32 * 32)
    block_rows = rows if rows <= target_rows else target_rows
    if num_cores > 1:
        # Ensure each TensorCore gets at least one block to stream.
        per_core = max(32, _round_up(pl.cdiv(rows, num_cores), 32))
        block_rows = min(block_rows, per_core)

    total_blocks = pl.cdiv(rows, block_rows)

    if num_cores > 1 and total_blocks > 1:
        # Leading CORE_PARALLEL axis actually shards across v7x's two TCs
        # (plain "parallel" does not). Clamped duplicate blocks are idempotent.
        cores = min(num_cores, total_blocks)
        steps = pl.cdiv(total_blocks, cores)
        grid = (cores, steps)
        idx = lambda c, i: (jnp.minimum(c * steps + i, total_blocks - 1), 0)
        semantics = (pltpu.CORE_PARALLEL, pltpu.ARBITRARY)
    else:
        grid = (total_blocks,)
        idx = lambda i: (i, 0)
        semantics = ("arbitrary",)

    spec = pl.BlockSpec((block_rows, lane_dim), idx)

    in_specs = [spec, spec, spec]
    args = [u2, s2, i2]
    if dynamic_decay:
        decay_arr = jax.nn.sigmoid(jnp.asarray(LIF_tau, jnp.float32)).reshape((1,))
        in_specs = [pl.BlockSpec(memory_space=pltpu.MemorySpace.SMEM)] + in_specs
        args = [decay_arr] + args
        kernel = functools.partial(_lif_kernel_dyn, thresh=float(thresh))
    else:
        kernel = functools.partial(_lif_kernel, decay=decay, thresh=float(thresh))

    bytes_accessed = n * (2 * u_itemsize
                          + jnp.dtype(S_before.dtype).itemsize
                          + jnp.dtype(I_in.dtype).itemsize
                          + jnp.dtype(s_out_dtype).itemsize)
    cost = pl.CostEstimate(flops=5 * n, transcendentals=0,
                           bytes_accessed=bytes_accessed)

    cp_kwargs = dict(dimension_semantics=semantics, vmem_limit_bytes=vmem_limit)
    if allow_input_fusion is not None:
        cp_kwargs["allow_input_fusion"] = allow_input_fusion

    u_out, s_out = pl.pallas_call(
        kernel,
        out_shape=(
            jax.ShapeDtypeStruct((rows, lane_dim), u_dtype),
            jax.ShapeDtypeStruct((rows, lane_dim), s_out_dtype),
        ),
        grid=grid,
        in_specs=in_specs,
        out_specs=(spec, spec),
        compiler_params=pltpu.CompilerParams(**cp_kwargs),
        cost_estimate=cost,
    )(*args)

    return u_out.reshape(orig_shape), s_out.reshape(orig_shape)


def _reference(LIF_U, S_before, I_in, LIF_tau, thresh):
    decay = 1.0 / (1.0 + math.exp(-float(LIF_tau)))
    u = decay * LIF_U * (1.0 - S_before.astype(LIF_U.dtype)) + I_in
    s = (u >= thresh).astype(LIF_U.dtype)
    return u, s


if __name__ == "__main__":
    key = jax.random.PRNGKey(0)
    k1, k2, k3 = jax.random.split(key, 3)

    B, C, H, W = 2, 4, 16, 16  # NCHW, small synthetic shapes
    LIF_tau = 2.0

    LIF_U = jax.random.normal(k1, (B, C, H, W), dtype=jnp.float32)
    S_before = (jax.random.uniform(k2, (B, C, H, W)) > 0.5).astype(jnp.float32)
    I_in = jax.random.normal(k3, (B, C, H, W), dtype=jnp.float32)

    u_ref, s_ref = _reference(LIF_U, S_before, I_in, LIF_tau, _DEFAULT_THRESH)

    # 1) Default path: identical semantics/dtypes to the PyTorch module.
    u_new, s_new = lif_node_forward(LIF_U, S_before, I_in, LIF_tau=LIF_tau)
    u_new, s_new = jax.block_until_ready((u_new, s_new))
    assert u_new.shape == (B, C, H, W) and s_new.shape == (B, C, H, W)
    assert jnp.allclose(u_new, u_ref, atol=1e-5, rtol=1e-5)
    assert jnp.array_equal(s_new, s_ref)

    # 2) Bandwidth-optimized path: int8 spikes in and out (~25-30% less HBM traffic).
    S_before_i8 = S_before.astype(jnp.int8)
    u_i8, s_i8 = lif_node_forward(LIF_U, S_before_i8, I_in, LIF_tau=LIF_tau,
                                  spike_dtype=jnp.int8)
    u_i8, s_i8 = jax.block_until_ready((u_i8, s_i8))
    assert jnp.allclose(u_i8, u_ref, atol=1e-5, rtol=1e-5)
    assert jnp.array_equal(s_i8.astype(jnp.float32), s_ref)

    print("KERNEL_OK")
</pallas_src>

<mosaic_0001>
module attributes {stable_mosaic.version = 11 : i64} {
  func.func @_lif_kernel(%arg0: i32, %arg1: memref<2x1024xf32, #tpu.memory_space<vmem>>, %arg2: memref<2x1024xf32, #tpu.memory_space<vmem>>, %arg3: memref<2x1024xf32, #tpu.memory_space<vmem>>, %arg4: memref<2x1024xf32, #tpu.memory_space<vmem>>, %arg5: memref<2x1024xf32, #tpu.memory_space<vmem>>) attributes {dimension_semantics = [#tpu.dimension_semantics<arbitrary>], iteration_bounds = array<i64: 1>, scalar_prefetch = 0 : i64, scratch_operands = 0 : i64, tpu.core_type = #tpu.core_type<tc>, window_params = [{transform_indices = @transform_0, window_bounds = array<i64: 2, 1024>}, {transform_indices = @transform_1, window_bounds = array<i64: 2, 1024>}, {transform_indices = @transform_2, window_bounds = array<i64: 2, 1024>}, {transform_indices = @transform_3, window_bounds = array<i64: 2, 1024>}, {transform_indices = @transform_4, window_bounds = array<i64: 2, 1024>}]} {
    %c0 = arith.constant 0 : index
    %c0_0 = arith.constant 0 : index
    %0 = vector.load %arg1[%c0, %c0_0] : memref<2x1024xf32, #tpu.memory_space<vmem>>, vector<2x1024xf32>
    %c0_1 = arith.constant 0 : index
    %c0_2 = arith.constant 0 : index
    %1 = vector.load %arg2[%c0_1, %c0_2] : memref<2x1024xf32, #tpu.memory_space<vmem>>, vector<2x1024xf32>
    %cst = arith.constant 0.880797088 : f32
    %2 = vector.broadcast %cst : f32 to vector<2x1024xf32>
    %3 = arith.mulf %2, %0 : vector<2x1024xf32>
    %cst_3 = arith.constant 1.000000e+00 : f32
    %4 = vector.broadcast %cst_3 : f32 to vector<2x1024xf32>
    %5 = arith.subf %4, %1 : vector<2x1024xf32>
    %6 = arith.mulf %3, %5 : vector<2x1024xf32>
    %c0_4 = arith.constant 0 : index
    %c0_5 = arith.constant 0 : index
    %7 = vector.load %arg3[%c0_4, %c0_5] : memref<2x1024xf32, #tpu.memory_space<vmem>>, vector<2x1024xf32>
    %8 = arith.addf %6, %7 : vector<2x1024xf32>
    %c0_6 = arith.constant 0 : index
    %c0_7 = arith.constant 0 : index
    %9 = vector.load %arg4[%c0_6, %c0_7] : memref<2x1024xf32, #tpu.memory_space<vmem>>, vector<2x1024xf32>
    tpu.vector_store %arg4[%c0_6, %c0_7], %8 {strides = array<i32>} : memref<2x1024xf32, #tpu.memory_space<vmem>>, vector<2x1024xf32>,
    %cst_8 = arith.constant 5.000000e-01 : f32
    %10 = vector.broadcast %cst_8 : f32 to vector<2x1024xf32>
    %11 = arith.cmpf oge, %8, %10 : vector<2x1024xf32>
    %12 = arith.extui %11 : vector<2x1024xi1> to vector<2x1024xi32>
    %13 = arith.sitofp %12 : vector<2x1024xi32> to vector<2x1024xf32>
    %c0_9 = arith.constant 0 : index
    %c0_10 = arith.constant 0 : index
    %14 = vector.load %arg5[%c0_9, %c0_10] : memref<2x1024xf32, #tpu.memory_space<vmem>>, vector<2x1024xf32>
    tpu.vector_store %arg5[%c0_9, %c0_10], %13 {strides = array<i32>} : memref<2x1024xf32, #tpu.memory_space<vmem>>, vector<2x1024xf32>,
    return
  }
  func.func @transform_0(%arg0: i32) -> (i32, i32) {
    %c0_i32 = arith.constant 0 : i32
    %c0_i32_0 = arith.constant 0 : i32
    return %arg0, %c0_i32 : i32, i32
  }
  func.func @transform_1(%arg0: i32) -> (i32, i32) {
    %c0_i32 = arith.constant 0 : i32
    %c0_i32_0 = arith.constant 0 : i32
    return %arg0, %c0_i32 : i32, i32
  }
  func.func @transform_2(%arg0: i32) -> (i32, i32) {
    %c0_i32 = arith.constant 0 : i32
    %c0_i32_0 = arith.constant 0 : i32
    return %arg0, %c0_i32 : i32, i32
  }
  func.func @transform_3(%arg0: i32) -> (i32, i32) {
    %c0_i32 = arith.constant 0 : i32
    %c0_i32_0 = arith.constant 0 : i32
    return %arg0, %c0_i32 : i32, i32
  }
  func.func @transform_4(%arg0: i32) -> (i32, i32) {
    %c0_i32 = arith.constant 0 : i32
    %c0_i32_0 = arith.constant 0 : i32
    return %arg0, %c0_i32 : i32, i32
  }
}

</mosaic_0001>

<llo_original>
// kernel: tpu_custom_call.1
$region0: #{tpu_custom_call.1}
  #allocation0 [shape = 'u32[]', space=smem, size = 0x4, offset = 0x4, fixed_abs, tag = 'smem constant byte address 0x4 - core index']
  #allocation1 [shape = 'u32[144,128]{1,0:T(1,128)}', space=vmem, size = 0x12000, scoped, tag = 'internal scratch']
  %s0 = inlined_call_operand.hbm [shape: f32[2,1024], index: 0, kind: input, shape index: {}]
  %s1 = inlined_call_operand.hbm [shape: f32[2,1024], index: 1, kind: input, shape index: {}]
  %s2 = inlined_call_operand.hbm [shape: f32[2,1024], index: 2, kind: input, shape index: {}]
  %s3 = inlined_call_operand.hbm [shape: f32[2,1024], index: 3, kind: output, shape index: {0}]
  %s4 = inlined_call_operand.hbm [shape: f32[2,1024], index: 4, kind: output, shape index: {1}]
  %5 = xla_tuple %s3, %s4
  %s6 = sld [smem:[#allocation0]]
  $region42: #{tpu_custom_call.1} parent=0
    _
  %s8 = ssub.s32 1, %s6
  %s9 = scalar_select 0, %s8, %s6
  $region1: #{tpu_custom_call.1} parent=0
    #allocation2 [shape = 'u8[8192]{0}', space=vmem, size = 0x2000, scoped, tag = 'input window, operand 0, single buffered']
    #allocation3 [shape = 's32[1]{0}', space=sflag, size = 0x4, scoped, tag = 'scoped memory for tpu_custom_call.1']
    #allocation4 [shape = 's32[1]{0}', space=sflag, size = 0x4, scoped, tag = 'scoped memory for tpu_custom_call.1']
    #allocation5 [shape = 'u8[8192]{0}', space=vmem, size = 0x2000, scoped, tag = 'input window, operand 1, single buffered']
    #allocation6 [shape = 's32[1]{0}', space=sflag, size = 0x4, scoped, tag = 'scoped memory for tpu_custom_call.1']
    #allocation7 [shape = 'u8[8192]{0}', space=vmem, size = 0x2000, scoped, tag = 'input window, operand 2, single buffered']
    #allocation8 [shape = 'u8[8192]{0}', space=vmem, size = 0x2000, scoped, tag = 'output window, operand 0, single buffered']
    #allocation9 [shape = 'u8[8192]{0}', space=vmem, size = 0x2000, scoped, tag = 'output window, operand 1, single buffered']
    #allocation10 [shape = 's32[1]{0}', space=sflag, size = 0x4, scoped, tag = 'scoped memory for tpu_custom_call.1']
    %10 = vsyncpa [#allocation3], 0
    %11 = vsyncpa [#allocation6], 0
    %12 = vsyncpa [#allocation4], 0
    %13 = vsyncpa [#allocation10], 0
    // Predicated region
    $region2: #{tpu_custom_call.1} parent=1 // pred_check
      _
    $region3: #{tpu_custom_call.1} parent=1 // pred_check_branch
      %15 = sbr.rel (0) target = $region5
    $region4: #{tpu_custom_call.1} parent=1 // pred_region
      %s17 = ssub.s32 256, 256
      %18 = vsyncadd [#allocation3], %s17
      %s20 = sshll.u32 [#allocation2], 4
      %s21 = int_to_ptr.vmem [resolvable:$true] %s20
      %23 = dma.hbm_to_vmem [thread:$0]  %s0, 256, %s21, [#allocation3]
    $region5: #{tpu_custom_call.1} parent=1 // pred_fallthru
      _
    // Predicated region
    $region6: #{tpu_custom_call.1} parent=1 // pred_check
      _
    $region7: #{tpu_custom_call.1} parent=1 // pred_check_branch
      %25 = sbr.rel (0) target = $region9
    $region8: #{tpu_custom_call.1} parent=1 // pred_region
      %s27 = ssub.s32 256, 256
      %28 = vsyncadd [#allocation6], %s27
      %s30 = sshll.u32 [#allocation5], 4
      %s31 = int_to_ptr.vmem [resolvable:$true] %s30
      %33 = dma.hbm_to_vmem [thread:$0]  %s1, 256, %s31, [#allocation6]
    $region9: #{tpu_custom_call.1} parent=1 // pred_fallthru
      _
    // Predicated region
    $region10: #{tpu_custom_call.1} parent=1 // pred_check
      _
    $region11: #{tpu_custom_call.1} parent=1 // pred_check_branch
      %35 = sbr.rel (0) target = $region13
    $region12: #{tpu_custom_call.1} parent=1 // pred_region
      %s37 = ssub.s32 256, 256
      %38 = vsyncadd [#allocation6], %s37
      %s40 = sshll.u32 [#allocation7], 4
      %s41 = int_to_ptr.vmem [resolvable:$true] %s40
      %43 = dma.hbm_to_vmem [thread:$0]  %s2, 256, %s41, [#allocation6]
    $region13: #{tpu_custom_call.1} parent=1 // pred_fallthru
      _
    // Predicated region
    $region14: #{tpu_custom_call.1} parent=1 // pred_check
      _
    $region15: #{tpu_custom_call.1} parent=1 // pred_check_branch
      %45 = sbr.rel (0) target = $region17
    $region16: #{tpu_custom_call.1} parent=1 // pred_region
      %46 = dma.done [#allocation3], 256
    $region17: #{tpu_custom_call.1} parent=1 // pred_fallthru
      _
    // Predicated region
    $region18: #{tpu_custom_call.1} parent=1 // pred_check
      _
    $region19: #{tpu_custom_call.1} parent=1 // pred_check_branch
      %48 = sbr.rel (0) target = $region21
    $region20: #{tpu_custom_call.1} parent=1 // pred_region
      %49 = dma.done [#allocation6], 256
    $region21: #{tpu_custom_call.1} parent=1 // pred_fallthru
      _
    // Predicated region
    $region22: #{tpu_custom_call.1} parent=1 // pred_check
      _
    $region23: #{tpu_custom_call.1} parent=1 // pred_check_branch
      %51 = sbr.rel (0) target = $region25
    $region24: #{tpu_custom_call.1} parent=1 // pred_region
      %52 = dma.done [#allocation6], 256
    $region25: #{tpu_custom_call.1} parent=1 // pred_fallthru
      _
    %v53 = vld [vmem:[#allocation2] sm:$0xff]
    %v54 = vld [vmem:[#allocation2 + $0x8] sm:$0xff]
    %v55 = vld [vmem:[#allocation5] sm:$0xff]
    %v56 = vld [vmem:[#allocation5 + $0x8] sm:$0xff]
    %v57 = vmul.f32 %v53, 0.8807971
    %v58 = vmul.f32 %v54, 0.8807971
    %v59 = vsub.f32 1.0, %v55
    %v60 = vsub.f32 1.0, %v56
    %v61 = vmul.f32 %v57, %v59
    %v62 = vmul.f32 %v58, %v60
    %v63 = vld [vmem:[#allocation7] sm:$0xff]
    %v64 = vld [vmem:[#allocation7 + $0x8] sm:$0xff]
    %v65 = vadd.f32 %v61, %v63
    %v66 = vadd.f32 %v62, %v64
    %67 = vst [vmem:[#allocation8] sm:$0xff] %v65
    %68 = vst [vmem:[#allocation8 + $0x8] sm:$0xff] %v66
    %vm69 = vcmp.ge.f32.partialorder %v65, 0.5
    %vm70 = vcmp.ge.f32.partialorder %v66, 0.5
    %v71 = vsel %vm69, 1, 0
    %v72 = vsel %vm70, 1, 0
    %v73 = vcvt.s32.f32 %v71
    %v74 = vcvt.s32.f32 %v72
    %75 = vst [vmem:[#allocation9] sm:$0xff] %v73
    %76 = vst [vmem:[#allocation9 + $0x8] sm:$0xff] %v74
    // Predicated region
    $region26: #{tpu_custom_call.1} parent=1 // pred_check
      _
    $region27: #{tpu_custom_call.1} parent=1 // pred_check_branch
      %78 = sbr.rel (0) target = $region29
    $region28: #{tpu_custom_call.1} parent=1 // pred_region
      %s80 = ssub.s32 256, 256
      %81 = vsyncadd [#allocation4], %s80
      %s83 = sshll.u32 [#allocation8], 4
      %s84 = int_to_ptr.vmem [resolvable:$true] %s83
      %86 = dma.vmem_to_hbm [thread:$0]  %s84, 256, %s3, [#allocation4]
    $region29: #{tpu_custom_call.1} parent=1 // pred_fallthru
      _
    // Predicated region
    $region30: #{tpu_custom_call.1} parent=1 // pred_check
      _
    $region31: #{tpu_custom_call.1} parent=1 // pred_check_branch
      %88 = sbr.rel (0) target = $region33
    $region32: #{tpu_custom_call.1} parent=1 // pred_region
      %s90 = ssub.s32 256, 256
      %91 = vsyncadd [#allocation10], %s90
      %s93 = sshll.u32 [#allocation9], 4
      %s94 = int_to_ptr.vmem [resolvable:$true] %s93
      %96 = dma.vmem_to_hbm [thread:$0]  %s94, 256, %s4, [#allocation10]
    $region33: #{tpu_custom_call.1} parent=1 // pred_fallthru
      _
    // Predicated region
    $region34: #{tpu_custom_call.1} parent=1 // pred_check
      _
    $region35: #{tpu_custom_call.1} parent=1 // pred_check_branch
      %98 = sbr.rel (0) target = $region37
    $region36: #{tpu_custom_call.1} parent=1 // pred_region
      %99 = dma.done [#allocation4], 256
    $region37: #{tpu_custom_call.1} parent=1 // pred_fallthru
      _
    // Predicated region
    $region38: #{tpu_custom_call.1} parent=1 // pred_check
      _
    $region39: #{tpu_custom_call.1} parent=1 // pred_check_branch
      %101 = sbr.rel (0) target = $region41
    $region40: #{tpu_custom_call.1} parent=1 // pred_region
      %102 = dma.done [#allocation10], 256
    $region41: #{tpu_custom_call.1} parent=1 // pred_fallthru
      _
    %103 = vsyncpa [#allocation3], 1
    %104 = vsyncpa [#allocation6], 1
    %105 = vsyncpa [#allocation4], 1
    %106 = vsyncpa [#allocation10], 1

</llo_original>
